<compile_context>
chip_gen: v6e
topology: v6e:2x2x1
jax: 0.10.0
libtpu: 0.0.40
codegen_flags: <defaults>
</compile_context>

<pallas_src>
import numpy as np
import jax
import jax.numpy as jnp
from jax.experimental import pallas as pl
from jax.experimental.pallas import tpu as pltpu


# ----------------------------------------------------------------------------
# Shared per-block math (runs inside the kernel, all f32)
# ----------------------------------------------------------------------------
def _net_and_loss(x1, x0, t, w1, w2, bias):
    """x1/x0: (Bblk, 3, L) endpoints; t: (Bblk, 3, L) or (Bblk, 1, 1) interpolants.

    Pointwise 3->6 channel "net":  out_c = sum_k w1[c,k]*x_interp_k + w2[c,k]*t_k + b_c
    Returns the block-partial sums of  ||g0||^2 - 2<x0,g0>  and  ||g1||^2 - 2<x1,g1>.
    Weights are Python-float compile-time constants -> pure VPU FMAs, no MXU.
    """
    x_interp = t * x1 + (1.0 - t) * x0            # (Bblk, 3, L)
    per_sample_t = (t.shape[1] == 1)

    def t_ch(k):
        return t[:, 0, :] if per_sample_t else t[:, k, :]

    d0 = None
    d1 = None
    for c in range(6):
        o = bias[c]
        for k in range(3):
            o = o + w1[c][k] * x_interp[:, k, :] + w2[c][k] * t_ch(k)
        if c < 3:
            term = o * (o - 2.0 * x0[:, c, :])
            d0 = term if d0 is None else d0 + term
        else:
            term = o * (o - 2.0 * x1[:, c - 3, :])
            d1 = term if d1 is None else d1 + term
    return jnp.sum(d0), jnp.sum(d1)


# ----------------------------------------------------------------------------
# Kernels
# ----------------------------------------------------------------------------
def _make_si_kernel(w1, w2, bias):
    # 'si' mode: interpolants == per-sample alpha (never materialized in HBM).
    def kernel(alpha_ref, x1_ref, x0_ref, loss0_ref, loss1_ref):
        first = (pl.program_id(0) == 0) & (pl.program_id(1) == 0)

        @pl.when(first)
        def _():
            loss0_ref[...] = jnp.zeros_like(loss0_ref)
            loss1_ref[...] = jnp.zeros_like(loss1_ref)

        x1 = x1_ref[...].astype(jnp.float32)
        x0 = x0_ref[...].astype(jnp.float32)
        t = alpha_ref[...]                        # (Bblk, 1, 1) f32, broadcasts
        s0, s1 = _net_and_loss(x1, x0, t, w1, w2, bias)
        loss0_ref[...] += s0
        loss1_ref[...] += s1

    return kernel


def _make_full_kernel(w1, w2, bias):
    # 'gnt' / 'lpft': interpolants are a full (B,3,HW) array.
    def kernel(x1_ref, x0_ref, t_ref, loss0_ref, loss1_ref):
        first = (pl.program_id(0) == 0) & (pl.program_id(1) == 0)

        @pl.when(first)
        def _():
            loss0_ref[...] = jnp.zeros_like(loss0_ref)
            loss1_ref[...] = jnp.zeros_like(loss1_ref)

        x1 = x1_ref[...].astype(jnp.float32)
        x0 = x0_ref[...].astype(jnp.float32)
        t = t_ref[...].astype(jnp.float32)
        s0, s1 = _net_and_loss(x1, x0, t, w1, w2, bias)
        loss0_ref[...] += s0
        loss1_ref[...] += s1

    return kernel


# ----------------------------------------------------------------------------
# Tiling / pallas_call wrapper
# ----------------------------------------------------------------------------
def _pick_block(B, HW, itemsize, n_big_inputs, vmem_budget_bytes=24 * 1024 * 1024):
    """Pick (Bblk, Lblk) so that all big inputs, double-buffered, fit the budget."""
    per_lane = 3 * itemsize * n_big_inputs * 2          # bytes per lane per sample
    max_lanes = max(1, vmem_budget_bytes // per_lane)   # Bblk * Lblk <= max_lanes
    if HW <= max_lanes:
        lblk = HW                                        # full spatial extent
        bmax = max(1, max_lanes // HW)
        bblk = max(d for d in range(1, B + 1) if (B % d == 0 and d <= bmax))
    else:
        bblk = 1
        cands = [l for l in range(128, min(HW, max_lanes) + 1, 128) if HW % l == 0]
        lblk = max(cands) if cands else HW               # fallback: whole row
    return bblk, lblk


def _loss_pallas(kernel, big_inputs, B, HW, alpha=None):
    itemsize = big_inputs[0].dtype.itemsize
    bblk, lblk = _pick_block(B, HW, itemsize, len(big_inputs))
    grid = (B // bblk, HW // lblk)

    img_spec = pl.BlockSpec((bblk, 3, lblk), lambda bt, lt: (bt, 0, lt))
    in_specs = []
    in_arrays = []
    if alpha is not None:
        in_specs.append(pl.BlockSpec((bblk, 1, 1), lambda bt, lt: (bt, 0, 0)))
        in_arrays.append(alpha)
    in_specs += [img_spec] * len(big_inputs)
    in_arrays += list(big_inputs)

    out_spec = pl.BlockSpec((1, 1), lambda bt, lt: (0, 0))

    loss0, loss1 = pl.pallas_call(
        kernel,
        out_shape=(jax.ShapeDtypeStruct((1, 1), jnp.float32),
                   jax.ShapeDtypeStruct((1, 1), jnp.float32)),
        grid_spec=pltpu.PrefetchScalarGridSpec(
            num_scalar_prefetch=0,
            grid=grid,
            in_specs=in_specs,
            out_specs=[out_spec, out_spec]),
        compiler_params=pltpu.CompilerParams(
            dimension_semantics=("arbitrary", "arbitrary"),
            vmem_limit_bytes=48 * 1024 * 1024),
    )(*in_arrays)
    # in-kernel sums are over (block, C, H, W); the batch mean is a scalar divide.
    return loss0[0, 0] / B, loss1[0, 0] / B


# ----------------------------------------------------------------------------
# Wrapper replicating the Trainer module
# ----------------------------------------------------------------------------
def _gaussian_kernel_1d(ksize, sigma):
    # Replicates cv2.getGaussianKernel(ksize, sigma)
    i = np.arange(ksize, dtype=np.float64)
    x = i - (ksize - 1) / 2.0
    g = np.exp(-(x * x) / (2.0 * sigma * sigma))
    g /= g.sum()
    return g.astype(np.float32)


class TrainerPallas:
    def __init__(self, mode, scale, initial_interpolants_length=51,
                 gauss_kernel_size=18, gauss_sigma=4.0,
                 input_dtype=jnp.bfloat16):
        self.mode = mode
        self.scale = float(scale)
        self.initial_interpolants_length = initial_interpolants_length
        self.padding = gauss_kernel_size // 2
        self.input_dtype = input_dtype  # HBM-resident image/noise dtype

        g1 = _gaussian_kernel_1d(gauss_kernel_size, gauss_sigma)
        gk2 = np.outer(g1, g1)
        gk = np.broadcast_to(gk2, (3, 1, gauss_kernel_size, gauss_kernel_size)).copy()
        self.gauss_kernel = jnp.asarray(gk / gk.sum(), jnp.float32)  # global normalization

        # Deterministic pointwise "net" (3 -> 6 channels).  The original module wraps
        # an arbitrary nn.Module `net`; here its weights are baked into the kernel as
        # compile-time constants.
        cin, cout = 3, 6
        w1 = (np.arange(cout * cin, dtype=np.float32).reshape(cout, cin) - 8.5) * 0.05
        w2 = (np.arange(cout * cin, dtype=np.float32)[::-1].reshape(cout, cin) - 8.5) * 0.03
        bias = np.linspace(-0.1, 0.1, cout, dtype=np.float32)
        w1_l = [[float(v) for v in row] for row in w1]
        w2_l = [[float(v) for v in row] for row in w2]
        b_l = [float(v) for v in bias]

        self._si_kernel = _make_si_kernel(w1_l, w2_l, b_l)
        self._full_kernel = _make_full_kernel(w1_l, w2_l, b_l)

        self._forward = jax.jit(self._forward_impl)

    # no_grad data-generation step of the module -> plain JAX glue
    def get_gaussian_term(self, key, batch):
        L = self.initial_interpolants_length
        g = jax.random.uniform(key, (batch, 3, L, L), jnp.float32)
        g = jax.lax.conv_general_dilated(
            g, self.gauss_kernel,
            window_strides=(1, 1),
            padding=((self.padding, self.padding), (self.padding, self.padding)),
            dimension_numbers=('NCHW', 'OIHW', 'NCHW'),
            feature_group_count=3)
        g = g[:, :, 10:-10, 10:-10]
        g = (g - g.min()) / (g.max() - g.min())
        g = g * 2.0 - 1.0
        return g * self.scale

    def _forward_impl(self, img, key):
        B, C, H, W = img.shape
        HW = H * W
        k_alpha, k_noise, k_x0, k_gauss = jax.random.split(key, 4)
        alpha = jax.random.uniform(k_alpha, (B, 1, 1), jnp.float32)

        # x1 = img, x0 ~ randn_like(img); stored bf16 (f32 accumulation in-kernel).
        x1 = img.reshape(B, C, HW).astype(self.input_dtype)
        x0 = jax.random.normal(k_x0, (B, C, HW), jnp.float32).astype(self.input_dtype)

        if self.mode == 'si':
            # interpolants = ones_like(img) * alpha  -> broadcast inside the kernel
            loss0, loss1 = _loss_pallas(self._si_kernel, [x1, x0], B, HW, alpha=alpha)
        elif self.mode == 'gnt':
            t = jnp.clip(alpha + jax.random.normal(k_noise, (B, C, HW), jnp.float32)
                         * self.scale, 0.0, 1.0).astype(self.input_dtype)
            loss0, loss1 = _loss_pallas(self._full_kernel, [x1, x0, t], B, HW)
        elif self.mode == 'lpft':
            g = self.get_gaussian_term(k_gauss, B)          # (B, 3, 32, 32)
            t4 = jnp.clip(g + alpha.reshape(B, 1, 1, 1), 0.0, 1.0)
            t = t4.reshape(B, C, HW).astype(self.input_dtype)  # requires 32x32 images (as in torch)
            loss0, loss1 = _loss_pallas(self._full_kernel, [x1, x0, t], B, HW)
        else:
            raise ValueError(f"unknown mode {self.mode}")

        loss = loss0 + loss1
        return loss, loss0, loss1

    def __call__(self, img, key):
        # Returns device scalars (no .item()-style host sync in the forward path).
        return self._forward(img, key)


if __name__ == "__main__":
    B, C, H, W = 2, 3, 16, 16
    key = jax.random.PRNGKey(0)
    k_img, k_run = jax.random.split(key)
    img = jax.random.uniform(k_img, (B, C, H, W), jnp.float32)

    trainer = TrainerPallas(mode='si', scale=0.05)
    loss, l0, l1 = trainer(img, k_run)
    jax.block_until_ready(loss)
    print("KERNEL_OK")
</pallas_src>

<mosaic_0001>
module attributes {stable_mosaic.version = 11 : i64} {
  func.func @kernel(%arg0: i32, %arg1: i32, %arg2: memref<2x1x1xf32, #tpu.memory_space<vmem>>, %arg3: memref<2x3x256xbf16, #tpu.memory_space<vmem>>, %arg4: memref<2x3x256xbf16, #tpu.memory_space<vmem>>, %arg5: memref<1x1xf32, #tpu.memory_space<vmem>>, %arg6: memref<1x1xf32, #tpu.memory_space<vmem>>) attributes {dimension_semantics = [#tpu.dimension_semantics<arbitrary>, #tpu.dimension_semantics<arbitrary>], iteration_bounds = array<i64: 1, 1>, scalar_prefetch = 0 : i64, scratch_operands = 0 : i64, tpu.core_type = #tpu.core_type<tc>, window_params = [{transform_indices = @transform_0, window_bounds = array<i64: 2, 1, 1>}, {transform_indices = @transform_1, window_bounds = array<i64: 2, 3, 256>}, {transform_indices = @transform_2, window_bounds = array<i64: 2, 3, 256>}, {pipeline_mode = #tpu.pipeline_mode<synchronous>, transform_indices = @transform_3, window_bounds = array<i64: 1, 1>}, {pipeline_mode = #tpu.pipeline_mode<synchronous>, transform_indices = @transform_4, window_bounds = array<i64: 1, 1>}]} {
    %c0_i32 = arith.constant 0 : i32
    %0 = arith.cmpi eq, %arg0, %c0_i32 : i32
    %c0_i32_0 = arith.constant 0 : i32
    %1 = arith.cmpi eq, %arg1, %c0_i32_0 : i32
    %2 = arith.andi %0, %1 : i1
    %3 = arith.extui %2 : i1 to i32
    %c0_i32_1 = arith.constant 0 : i32
    %4 = arith.cmpi ne, %3, %c0_i32_1 : i32
    scf.if %4 {
      %cst_68 = arith.constant 0.000000e+00 : f32
      %259 = vector.broadcast %cst_68 : f32 to vector<1x1xf32>
      %c0_69 = arith.constant 0 : index
      %c0_70 = arith.constant 0 : index
      %260 = vector.load %arg5[%c0_69, %c0_70] : memref<1x1xf32, #tpu.memory_space<vmem>>, vector<1x1xf32>
      tpu.vector_store %arg5[%c0_69, %c0_70], %259 {strides = array<i32>} : memref<1x1xf32, #tpu.memory_space<vmem>>, vector<1x1xf32>,
      %cst_71 = arith.constant 0.000000e+00 : f32
      %261 = vector.broadcast %cst_71 : f32 to vector<1x1xf32>
      %c0_72 = arith.constant 0 : index
      %c0_73 = arith.constant 0 : index
      %262 = vector.load %arg6[%c0_72, %c0_73] : memref<1x1xf32, #tpu.memory_space<vmem>>, vector<1x1xf32>
      tpu.vector_store %arg6[%c0_72, %c0_73], %261 {strides = array<i32>} : memref<1x1xf32, #tpu.memory_space<vmem>>, vector<1x1xf32>,
    } else {
    }
    %c0 = arith.constant 0 : index
    %c0_2 = arith.constant 0 : index
    %c0_3 = arith.constant 0 : index
    %5 = vector.load %arg3[%c0, %c0_2, %c0_3] : memref<2x3x256xbf16, #tpu.memory_space<vmem>>, vector<2x3x256xbf16>
    %6 = arith.extf %5 : vector<2x3x256xbf16> to vector<2x3x256xf32>
    %c0_4 = arith.constant 0 : index
    %c0_5 = arith.constant 0 : index
    %c0_6 = arith.constant 0 : index
    %7 = vector.load %arg4[%c0_4, %c0_5, %c0_6] : memref<2x3x256xbf16, #tpu.memory_space<vmem>>, vector<2x3x256xbf16>
    %8 = arith.extf %7 : vector<2x3x256xbf16> to vector<2x3x256xf32>
    %c0_7 = arith.constant 0 : index
    %c0_8 = arith.constant 0 : index
    %c0_9 = arith.constant 0 : index
    %9 = vector.load %arg2[%c0_7, %c0_8, %c0_9] : memref<2x1x1xf32, #tpu.memory_space<vmem>>, vector<2x1x1xf32>
    %10 = vector.broadcast %9 : vector<2x1x1xf32> to vector<2x3x256xf32>
    %11 = arith.mulf %10, %6 : vector<2x3x256xf32>
    %cst = arith.constant 1.000000e+00 : f32
    %12 = vector.broadcast %cst : f32 to vector<2x1x1xf32>
    %13 = arith.subf %12, %9 : vector<2x1x1xf32>
    %14 = vector.broadcast %13 : vector<2x1x1xf32> to vector<2x3x256xf32>
    %15 = arith.mulf %14, %8 : vector<2x3x256xf32>
    %16 = arith.addf %11, %15 : vector<2x3x256xf32>
    %17 = vector.extract_strided_slice %16 {offsets = [0, 0, 0], sizes = [2, 1, 256], strides = [1, 1, 1]} : vector<2x3x256xf32> to vector<2x1x256xf32>
    %18 = vector.shape_cast %17 : vector<2x1x256xf32> to vector<2x256xf32>
    %cst_10 = arith.constant -4.250000e-01 : f32
    %19 = vector.broadcast %cst_10 : f32 to vector<2x256xf32>
    %20 = arith.mulf %19, %18 : vector<2x256xf32>
    %cst_11 = arith.constant -1.000000e-01 : f32
    %21 = vector.broadcast %cst_11 : f32 to vector<2x256xf32>
    %22 = arith.addf %21, %20 : vector<2x256xf32>
    %23 = vector.shape_cast %9 : vector<2x1x1xf32> to vector<2x1xf32>
    %cst_12 = arith.constant 2.550000e-01 : f32
    %24 = vector.broadcast %cst_12 : f32 to vector<2x1xf32>
    %25 = arith.mulf %24, %23 : vector<2x1xf32>
    %26 = vector.broadcast %25 : vector<2x1xf32> to vector<2x256xf32>
    %27 = arith.addf %22, %26 : vector<2x256xf32>
    %28 = vector.extract_strided_slice %16 {offsets = [0, 1, 0], sizes = [2, 1, 256], strides = [1, 1, 1]} : vector<2x3x256xf32> to vector<2x1x256xf32>
    %29 = vector.shape_cast %28 : vector<2x1x256xf32> to vector<2x256xf32>
    %cst_13 = arith.constant -3.750000e-01 : f32
    %30 = vector.broadcast %cst_13 : f32 to vector<2x256xf32>
    %31 = arith.mulf %30, %29 : vector<2x256xf32>
    %32 = arith.addf %27, %31 : vector<2x256xf32>
    %33 = vector.shape_cast %9 : vector<2x1x1xf32> to vector<2x1xf32>
    %cst_14 = arith.constant 2.250000e-01 : f32
    %34 = vector.broadcast %cst_14 : f32 to vector<2x1xf32>
    %35 = arith.mulf %34, %33 : vector<2x1xf32>
    %36 = vector.broadcast %35 : vector<2x1xf32> to vector<2x256xf32>
    %37 = arith.addf %32, %36 : vector<2x256xf32>
    %38 = vector.extract_strided_slice %16 {offsets = [0, 2, 0], sizes = [2, 1, 256], strides = [1, 1, 1]} : vector<2x3x256xf32> to vector<2x1x256xf32>
    %39 = vector.shape_cast %38 : vector<2x1x256xf32> to vector<2x256xf32>
    %cst_15 = arith.constant -0.325000018 : f32
    %40 = vector.broadcast %cst_15 : f32 to vector<2x256xf32>
    %41 = arith.mulf %40, %39 : vector<2x256xf32>
    %42 = arith.addf %37, %41 : vector<2x256xf32>
    %43 = vector.shape_cast %9 : vector<2x1x1xf32> to vector<2x1xf32>
    %cst_16 = arith.constant 1.950000e-01 : f32
    %44 = vector.broadcast %cst_16 : f32 to vector<2x1xf32>
    %45 = arith.mulf %44, %43 : vector<2x1xf32>
    %46 = vector.broadcast %45 : vector<2x1xf32> to vector<2x256xf32>
    %47 = arith.addf %42, %46 : vector<2x256xf32>
    %48 = vector.extract_strided_slice %8 {offsets = [0, 0, 0], sizes = [2, 1, 256], strides = [1, 1, 1]} : vector<2x3x256xf32> to vector<2x1x256xf32>
    %49 = vector.shape_cast %48 : vector<2x1x256xf32> to vector<2x256xf32>
    %cst_17 = arith.constant 2.000000e+00 : f32
    %50 = vector.broadcast %cst_17 : f32 to vector<2x256xf32>
    %51 = arith.mulf %50, %49 : vector<2x256xf32>
    %52 = arith.subf %47, %51 : vector<2x256xf32>
    %53 = arith.mulf %47, %52 : vector<2x256xf32>
    %54 = vector.extract_strided_slice %16 {offsets = [0, 0, 0], sizes = [2, 1, 256], strides = [1, 1, 1]} : vector<2x3x256xf32> to vector<2x1x256xf32>
    %55 = vector.shape_cast %54 : vector<2x1x256xf32> to vector<2x256xf32>
    %cst_18 = arith.constant -2.750000e-01 : f32
    %56 = vector.broadcast %cst_18 : f32 to vector<2x256xf32>
    %57 = arith.mulf %56, %55 : vector<2x256xf32>
    %cst_19 = arith.constant -6.000000e-02 : f32
    %58 = vector.broadcast %cst_19 : f32 to vector<2x256xf32>
    %59 = arith.addf %58, %57 : vector<2x256xf32>
    %60 = vector.shape_cast %9 : vector<2x1x1xf32> to vector<2x1xf32>
    %cst_20 = arith.constant 0.164999992 : f32
    %61 = vector.broadcast %cst_20 : f32 to vector<2x1xf32>
    %62 = arith.mulf %61, %60 : vector<2x1xf32>
    %63 = vector.broadcast %62 : vector<2x1xf32> to vector<2x256xf32>
    %64 = arith.addf %59, %63 : vector<2x256xf32>
    %65 = vector.extract_strided_slice %16 {offsets = [0, 1, 0], sizes = [2, 1, 256], strides = [1, 1, 1]} : vector<2x3x256xf32> to vector<2x1x256xf32>
    %66 = vector.shape_cast %65 : vector<2x1x256xf32> to vector<2x256xf32>
    %cst_21 = arith.constant -0.225000009 : f32
    %67 = vector.broadcast %cst_21 : f32 to vector<2x256xf32>
    %68 = arith.mulf %67, %66 : vector<2x256xf32>
    %69 = arith.addf %64, %68 : vector<2x256xf32>
    %70 = vector.shape_cast %9 : vector<2x1x1xf32> to vector<2x1xf32>
    %cst_22 = arith.constant 0.13499999 : f32
    %71 = vector.broadcast %cst_22 : f32 to vector<2x1xf32>
    %72 = arith.mulf %71, %70 : vector<2x1xf32>
    %73 = vector.broadcast %72 : vector<2x1xf32> to vector<2x256xf32>
    %74 = arith.addf %69, %73 : vector<2x256xf32>
    %75 = vector.extract_strided_slice %16 {offsets = [0, 2, 0], sizes = [2, 1, 256], strides = [1, 1, 1]} : vector<2x3x256xf32> to vector<2x1x256xf32>
    %76 = vector.shape_cast %75 : vector<2x1x256xf32> to vector<2x256xf32>
    %cst_23 = arith.constant -1.750000e-01 : f32
    %77 = vector.broadcast %cst_23 : f32 to vector<2x256xf32>
    %78 = arith.mulf %77, %76 : vector<2x256xf32>
    %79 = arith.addf %74, %78 : vector<2x256xf32>
    %80 = vector.shape_cast %9 : vector<2x1x1xf32> to vector<2x1xf32>
    %cst_24 = arith.constant 1.050000e-01 : f32
    %81 = vector.broadcast %cst_24 : f32 to vector<2x1xf32>
    %82 = arith.mulf %81, %80 : vector<2x1xf32>
    %83 = vector.broadcast %82 : vector<2x1xf32> to vector<2x256xf32>
    %84 = arith.addf %79, %83 : vector<2x256xf32>
    %85 = vector.extract_strided_slice %8 {offsets = [0, 1, 0], sizes = [2, 1, 256], strides = [1, 1, 1]} : vector<2x3x256xf32> to vector<2x1x256xf32>
    %86 = vector.shape_cast %85 : vector<2x1x256xf32> to vector<2x256xf32>
    %cst_25 = arith.constant 2.000000e+00 : f32
    %87 = vector.broadcast %cst_25 : f32 to vector<2x256xf32>
    %88 = arith.mulf %87, %86 : vector<2x256xf32>
    %89 = arith.subf %84, %88 : vector<2x256xf32>
    %90 = arith.mulf %84, %89 : vector<2x256xf32>
    %91 = arith.addf %53, %90 : vector<2x256xf32>
    %92 = vector.extract_strided_slice %16 {offsets = [0, 0, 0], sizes = [2, 1, 256], strides = [1, 1, 1]} : vector<2x3x256xf32> to vector<2x1x256xf32>
    %93 = vector.shape_cast %92 : vector<2x1x256xf32> to vector<2x256xf32>
    %cst_26 = arith.constant -1.250000e-01 : f32
    %94 = vector.broadcast %cst_26 : f32 to vector<2x256xf32>
    %95 = arith.mulf %94, %93 : vector<2x256xf32>
    %cst_27 = arith.constant -2.000000e-02 : f32
    %96 = vector.broadcast %cst_27 : f32 to vector<2x256xf32>
    %97 = arith.addf %96, %95 : vector<2x256xf32>
    %98 = vector.shape_cast %9 : vector<2x1x1xf32> to vector<2x1xf32>
    %cst_28 = arith.constant 0.0749999955 : f32
    %99 = vector.broadcast %cst_28 : f32 to vector<2x1xf32>
    %100 = arith.mulf %99, %98 : vector<2x1xf32>
    %101 = vector.broadcast %100 : vector<2x1xf32> to vector<2x256xf32>
    %102 = arith.addf %97, %101 : vector<2x256xf32>
    %103 = vector.extract_strided_slice %16 {offsets = [0, 1, 0], sizes = [2, 1, 256], strides = [1, 1, 1]} : vector<2x3x256xf32> to vector<2x1x256xf32>
    %104 = vector.shape_cast %103 : vector<2x1x256xf32> to vector<2x256xf32>
    %cst_29 = arith.constant -7.500000e-02 : f32
    %105 = vector.broadcast %cst_29 : f32 to vector<2x256xf32>
    %106 = arith.mulf %105, %104 : vector<2x256xf32>
    %107 = arith.addf %102, %106 : vector<2x256xf32>
    %108 = vector.shape_cast %9 : vector<2x1x1xf32> to vector<2x1xf32>
    %cst_30 = arith.constant 0.0449999981 : f32
    %109 = vector.broadcast %cst_30 : f32 to vector<2x1xf32>
    %110 = arith.mulf %109, %108 : vector<2x1xf32>
    %111 = vector.broadcast %110 : vector<2x1xf32> to vector<2x256xf32>
    %112 = arith.addf %107, %111 : vector<2x256xf32>
    %113 = vector.extract_strided_slice %16 {offsets = [0, 2, 0], sizes = [2, 1, 256], strides = [1, 1, 1]} : vector<2x3x256xf32> to vector<2x1x256xf32>
    %114 = vector.shape_cast %113 : vector<2x1x256xf32> to vector<2x256xf32>
    %cst_31 = arith.constant -2.500000e-02 : f32
    %115 = vector.broadcast %cst_31 : f32 to vector<2x256xf32>
    %116 = arith.mulf %115, %114 : vector<2x256xf32>
    %117 = arith.addf %112, %116 : vector<2x256xf32>
    %118 = vector.shape_cast %9 : vector<2x1x1xf32> to vector<2x1xf32>
    %cst_32 = arith.constant 1.500000e-02 : f32
    %119 = vector.broadcast %cst_32 : f32 to vector<2x1xf32>
    %120 = arith.mulf %119, %118 : vector<2x1xf32>
    %121 = vector.broadcast %120 : vector<2x1xf32> to vector<2x256xf32>
    %122 = arith.addf %117, %121 : vector<2x256xf32>
    %123 = vector.extract_strided_slice %8 {offsets = [0, 2, 0], sizes = [2, 1, 256], strides = [1, 1, 1]} : vector<2x3x256xf32> to vector<2x1x256xf32>
    %124 = vector.shape_cast %123 : vector<2x1x256xf32> to vector<2x256xf32>
    %cst_33 = arith.constant 2.000000e+00 : f32
    %125 = vector.broadcast %cst_33 : f32 to vector<2x256xf32>
    %126 = arith.mulf %125, %124 : vector<2x256xf32>
    %127 = arith.subf %122, %126 : vector<2x256xf32>
    %128 = arith.mulf %122, %127 : vector<2x256xf32>
    %129 = arith.addf %91, %128 : vector<2x256xf32>
    %130 = vector.extract_strided_slice %16 {offsets = [0, 0, 0], sizes = [2, 1, 256], strides = [1, 1, 1]} : vector<2x3x256xf32> to vector<2x1x256xf32>
    %131 = vector.shape_cast %130 : vector<2x1x256xf32> to vector<2x256xf32>
    %cst_34 = arith.constant 2.500000e-02 : f32
    %132 = vector.broadcast %cst_34 : f32 to vector<2x256xf32>
    %133 = arith.mulf %132, %131 : vector<2x256xf32>
    %cst_35 = arith.constant 2.000000e-02 : f32
    %134 = vector.broadcast %cst_35 : f32 to vector<2x256xf32>
    %135 = arith.addf %134, %133 : vector<2x256xf32>
    %136 = vector.shape_cast %9 : vector<2x1x1xf32> to vector<2x1xf32>
    %cst_36 = arith.constant -1.500000e-02 : f32
    %137 = vector.broadcast %cst_36 : f32 to vector<2x1xf32>
    %138 = arith.mulf %137, %136 : vector<2x1xf32>
    %139 = vector.broadcast %138 : vector<2x1xf32> to vector<2x256xf32>
    %140 = arith.addf %135, %139 : vector<2x256xf32>
    %141 = vector.extract_strided_slice %16 {offsets = [0, 1, 0], sizes = [2, 1, 256], strides = [1, 1, 1]} : vector<2x3x256xf32> to vector<2x1x256xf32>
    %142 = vector.shape_cast %141 : vector<2x1x256xf32> to vector<2x256xf32>
    %cst_37 = arith.constant 7.500000e-02 : f32
    %143 = vector.broadcast %cst_37 : f32 to vector<2x256xf32>
    %144 = arith.mulf %143, %142 : vector<2x256xf32>
    %145 = arith.addf %140, %144 : vector<2x256xf32>
    %146 = vector.shape_cast %9 : vector<2x1x1xf32> to vector<2x1xf32>
    %cst_38 = arith.constant -0.0449999981 : f32
    %147 = vector.broadcast %cst_38 : f32 to vector<2x1xf32>
    %148 = arith.mulf %147, %146 : vector<2x1xf32>
    %149 = vector.broadcast %148 : vector<2x1xf32> to vector<2x256xf32>
    %150 = arith.addf %145, %149 : vector<2x256xf32>
    %151 = vector.extract_strided_slice %16 {offsets = [0, 2, 0], sizes = [2, 1, 256], strides = [1, 1, 1]} : vector<2x3x256xf32> to vector<2x1x256xf32>
    %152 = vector.shape_cast %151 : vector<2x1x256xf32> to vector<2x256xf32>
    %cst_39 = arith.constant 1.250000e-01 : f32
    %153 = vector.broadcast %cst_39 : f32 to vector<2x256xf32>
    %154 = arith.mulf %153, %152 : vector<2x256xf32>
    %155 = arith.addf %150, %154 : vector<2x256xf32>
    %156 = vector.shape_cast %9 : vector<2x1x1xf32> to vector<2x1xf32>
    %cst_40 = arith.constant -0.0749999955 : f32
    %157 = vector.broadcast %cst_40 : f32 to vector<2x1xf32>
    %158 = arith.mulf %157, %156 : vector<2x1xf32>
    %159 = vector.broadcast %158 : vector<2x1xf32> to vector<2x256xf32>
    %160 = arith.addf %155, %159 : vector<2x256xf32>
    %161 = vector.extract_strided_slice %6 {offsets = [0, 0, 0], sizes = [2, 1, 256], strides = [1, 1, 1]} : vector<2x3x256xf32> to vector<2x1x256xf32>
    %162 = vector.shape_cast %161 : vector<2x1x256xf32> to vector<2x256xf32>
    %cst_41 = arith.constant 2.000000e+00 : f32
    %163 = vector.broadcast %cst_41 : f32 to vector<2x256xf32>
    %164 = arith.mulf %163, %162 : vector<2x256xf32>
    %165 = arith.subf %160, %164 : vector<2x256xf32>
    %166 = arith.mulf %160, %165 : vector<2x256xf32>
    %167 = vector.extract_strided_slice %16 {offsets = [0, 0, 0], sizes = [2, 1, 256], strides = [1, 1, 1]} : vector<2x3x256xf32> to vector<2x1x256xf32>
    %168 = vector.shape_cast %167 : vector<2x1x256xf32> to vector<2x256xf32>
    %cst_42 = arith.constant 1.750000e-01 : f32
    %169 = vector.broadcast %cst_42 : f32 to vector<2x256xf32>
    %170 = arith.mulf %169, %168 : vector<2x256xf32>
    %cst_43 = arith.constant 6.000000e-02 : f32
    %171 = vector.broadcast %cst_43 : f32 to vector<2x256xf32>
    %172 = arith.addf %171, %170 : vector<2x256xf32>
    %173 = vector.shape_cast %9 : vector<2x1x1xf32> to vector<2x1xf32>
    %cst_44 = arith.constant -1.050000e-01 : f32
    %174 = vector.broadcast %cst_44 : f32 to vector<2x1xf32>
    %175 = arith.mulf %174, %173 : vector<2x1xf32>
    %176 = vector.broadcast %175 : vector<2x1xf32> to vector<2x256xf32>
    %177 = arith.addf %172, %176 : vector<2x256xf32>
    %178 = vector.extract_strided_slice %16 {offsets = [0, 1, 0], sizes = [2, 1, 256], strides = [1, 1, 1]} : vector<2x3x256xf32> to vector<2x1x256xf32>
    %179 = vector.shape_cast %178 : vector<2x1x256xf32> to vector<2x256xf32>
    %cst_45 = arith.constant 0.225000009 : f32
    %180 = vector.broadcast %cst_45 : f32 to vector<2x256xf32>
    %181 = arith.mulf %180, %179 : vector<2x256xf32>
    %182 = arith.addf %177, %181 : vector<2x256xf32>
    %183 = vector.shape_cast %9 : vector<2x1x1xf32> to vector<2x1xf32>
    %cst_46 = arith.constant -0.13499999 : f32
    %184 = vector.broadcast %cst_46 : f32 to vector<2x1xf32>
    %185 = arith.mulf %184, %183 : vector<2x1xf32>
    %186 = vector.broadcast %185 : vector<2x1xf32> to vector<2x256xf32>
    %187 = arith.addf %182, %186 : vector<2x256xf32>
    %188 = vector.extract_strided_slice %16 {offsets = [0, 2, 0], sizes = [2, 1, 256], strides = [1, 1, 1]} : vector<2x3x256xf32> to vector<2x1x256xf32>
    %189 = vector.shape_cast %188 : vector<2x1x256xf32> to vector<2x256xf32>
    %cst_47 = arith.constant 2.750000e-01 : f32
    %190 = vector.broadcast %cst_47 : f32 to vector<2x256xf32>
    %191 = arith.mulf %190, %189 : vector<2x256xf32>
    %192 = arith.addf %187, %191 : vector<2x256xf32>
    %193 = vector.shape_cast %9 : vector<2x1x1xf32> to vector<2x1xf32>
    %cst_48 = arith.constant -0.164999992 : f32
    %194 = vector.broadcast %cst_48 : f32 to vector<2x1xf32>
    %195 = arith.mulf %194, %193 : vector<2x1xf32>
    %196 = vector.broadcast %195 : vector<2x1xf32> to vector<2x256xf32>
    %197 = arith.addf %192, %196 : vector<2x256xf32>
    %198 = vector.extract_strided_slice %6 {offsets = [0, 1, 0], sizes = [2, 1, 256], strides = [1, 1, 1]} : vector<2x3x256xf32> to vector<2x1x256xf32>
    %199 = vector.shape_cast %198 : vector<2x1x256xf32> to vector<2x256xf32>
    %cst_49 = arith.constant 2.000000e+00 : f32
    %200 = vector.broadcast %cst_49 : f32 to vector<2x256xf32>
    %201 = arith.mulf %200, %199 : vector<2x256xf32>
    %202 = arith.subf %197, %201 : vector<2x256xf32>
    %203 = arith.mulf %197, %202 : vector<2x256xf32>
    %204 = arith.addf %166, %203 : vector<2x256xf32>
    %205 = vector.extract_strided_slice %16 {offsets = [0, 0, 0], sizes = [2, 1, 256], strides = [1, 1, 1]} : vector<2x3x256xf32> to vector<2x1x256xf32>
    %206 = vector.shape_cast %205 : vector<2x1x256xf32> to vector<2x256xf32>
    %cst_50 = arith.constant 0.325000018 : f32
    %207 = vector.broadcast %cst_50 : f32 to vector<2x256xf32>
    %208 = arith.mulf %207, %206 : vector<2x256xf32>
    %cst_51 = arith.constant 1.000000e-01 : f32
    %209 = vector.broadcast %cst_51 : f32 to vector<2x256xf32>
    %210 = arith.addf %209, %208 : vector<2x256xf32>
    %211 = vector.shape_cast %9 : vector<2x1x1xf32> to vector<2x1xf32>
    %cst_52 = arith.constant -1.950000e-01 : f32
    %212 = vector.broadcast %cst_52 : f32 to vector<2x1xf32>
    %213 = arith.mulf %212, %211 : vector<2x1xf32>
    %214 = vector.broadcast %213 : vector<2x1xf32> to vector<2x256xf32>
    %215 = arith.addf %210, %214 : vector<2x256xf32>
    %216 = vector.extract_strided_slice %16 {offsets = [0, 1, 0], sizes = [2, 1, 256], strides = [1, 1, 1]} : vector<2x3x256xf32> to vector<2x1x256xf32>
    %217 = vector.shape_cast %216 : vector<2x1x256xf32> to vector<2x256xf32>
    %cst_53 = arith.constant 3.750000e-01 : f32
    %218 = vector.broadcast %cst_53 : f32 to vector<2x256xf32>
    %219 = arith.mulf %218, %217 : vector<2x256xf32>
    %220 = arith.addf %215, %219 : vector<2x256xf32>
    %221 = vector.shape_cast %9 : vector<2x1x1xf32> to vector<2x1xf32>
    %cst_54 = arith.constant -2.250000e-01 : f32
    %222 = vector.broadcast %cst_54 : f32 to vector<2x1xf32>
    %223 = arith.mulf %222, %221 : vector<2x1xf32>
    %224 = vector.broadcast %223 : vector<2x1xf32> to vector<2x256xf32>
    %225 = arith.addf %220, %224 : vector<2x256xf32>
    %226 = vector.extract_strided_slice %16 {offsets = [0, 2, 0], sizes = [2, 1, 256], strides = [1, 1, 1]} : vector<2x3x256xf32> to vector<2x1x256xf32>
    %227 = vector.shape_cast %226 : vector<2x1x256xf32> to vector<2x256xf32>
    %cst_55 = arith.constant 4.250000e-01 : f32
    %228 = vector.broadcast %cst_55 : f32 to vector<2x256xf32>
    %229 = arith.mulf %228, %227 : vector<2x256xf32>
    %230 = arith.addf %225, %229 : vector<2x256xf32>
    %231 = vector.shape_cast %9 : vector<2x1x1xf32> to vector<2x1xf32>
    %cst_56 = arith.constant -2.550000e-01 : f32
    %232 = vector.broadcast %cst_56 : f32 to vector<2x1xf32>
    %233 = arith.mulf %232, %231 : vector<2x1xf32>
    %234 = vector.broadcast %233 : vector<2x1xf32> to vector<2x256xf32>
    %235 = arith.addf %230, %234 : vector<2x256xf32>
    %236 = vector.extract_strided_slice %6 {offsets = [0, 2, 0], sizes = [2, 1, 256], strides = [1, 1, 1]} : vector<2x3x256xf32> to vector<2x1x256xf32>
    %237 = vector.shape_cast %236 : vector<2x1x256xf32> to vector<2x256xf32>
    %cst_57 = arith.constant 2.000000e+00 : f32
    %238 = vector.broadcast %cst_57 : f32 to vector<2x256xf32>
    %239 = arith.mulf %238, %237 : vector<2x256xf32>
    %240 = arith.subf %235, %239 : vector<2x256xf32>
    %241 = arith.mulf %235, %240 : vector<2x256xf32>
    %242 = arith.addf %204, %241 : vector<2x256xf32>
    %243 = vector.shape_cast %129 : vector<2x256xf32> to vector<1x2x256xf32>
    %cst_58 = arith.constant dense<0.000000e+00> : vector<1xf32>
    %244 = vector.multi_reduction <add>, %243, %cst_58 [1, 2] : vector<1x2x256xf32> to vector<1xf32>
    %245 = vector.shape_cast %244 : vector<1xf32> to vector<1x1x1xf32>
    %246 = vector.extract %245[0, 0, 0] : f32 from vector<1x1x1xf32>
    %247 = vector.shape_cast %242 : vector<2x256xf32> to vector<1x2x256xf32>
    %cst_59 = arith.constant dense<0.000000e+00> : vector<1xf32>
    %248 = vector.multi_reduction <add>, %247, %cst_59 [1, 2] : vector<1x2x256xf32> to vector<1xf32>
    %249 = vector.shape_cast %248 : vector<1xf32> to vector<1x1x1xf32>
    %250 = vector.extract %249[0, 0, 0] : f32 from vector<1x1x1xf32>
    %c0_60 = arith.constant 0 : index
    %c0_61 = arith.constant 0 : index
    %251 = vector.load %arg5[%c0_60, %c0_61] : memref<1x1xf32, #tpu.memory_space<vmem>>, vector<1x1xf32>
    %252 = vector.broadcast %246 : f32 to vector<1x1xf32>
    %253 = arith.addf %251, %252 : vector<1x1xf32>
    %c0_62 = arith.constant 0 : index
    %c0_63 = arith.constant 0 : index
    %254 = vector.load %arg5[%c0_62, %c0_63] : memref<1x1xf32, #tpu.memory_space<vmem>>, vector<1x1xf32>
    tpu.vector_store %arg5[%c0_62, %c0_63], %253 {strides = array<i32>} : memref<1x1xf32, #tpu.memory_space<vmem>>, vector<1x1xf32>,
    %c0_64 = arith.constant 0 : index
    %c0_65 = arith.constant 0 : index
    %255 = vector.load %arg6[%c0_64, %c0_65] : memref<1x1xf32, #tpu.memory_space<vmem>>, vector<1x1xf32>
    %256 = vector.broadcast %250 : f32 to vector<1x1xf32>
    %257 = arith.addf %255, %256 : vector<1x1xf32>
    %c0_66 = arith.constant 0 : index
    %c0_67 = arith.constant 0 : index
    %258 = vector.load %arg6[%c0_66, %c0_67] : memref<1x1xf32, #tpu.memory_space<vmem>>, vector<1x1xf32>
    tpu.vector_store %arg6[%c0_66, %c0_67], %257 {strides = array<i32>} : memref<1x1xf32, #tpu.memory_space<vmem>>, vector<1x1xf32>,
    return
  }
  func.func @transform_0(%arg0: i32, %arg1: i32) -> (i32, i32, i32) {
    %c0_i32 = arith.constant 0 : i32
    %c0_i32_0 = arith.constant 0 : i32
    %c0_i32_1 = arith.constant 0 : i32
    return %arg0, %c0_i32, %c0_i32_0 : i32, i32, i32
  }
  func.func @transform_1(%arg0: i32, %arg1: i32) -> (i32, i32, i32) {
    %c0_i32 = arith.constant 0 : i32
    %c0_i32_0 = arith.constant 0 : i32
    return %arg0, %c0_i32, %arg1 : i32, i32, i32
  }
  func.func @transform_2(%arg0: i32, %arg1: i32) -> (i32, i32, i32) {
    %c0_i32 = arith.constant 0 : i32
    %c0_i32_0 = arith.constant 0 : i32
    return %arg0, %c0_i32, %arg1 : i32, i32, i32
  }
  func.func @transform_3(%arg0: i32, %arg1: i32) -> (i32, i32) {
    %c0_i32 = arith.constant 0 : i32
    %c0_i32_0 = arith.constant 0 : i32
    %c0_i32_1 = arith.constant 0 : i32
    return %c0_i32, %c0_i32_0 : i32, i32
  }
  func.func @transform_4(%arg0: i32, %arg1: i32) -> (i32, i32) {
    %c0_i32 = arith.constant 0 : i32
    %c0_i32_0 = arith.constant 0 : i32
    %c0_i32_1 = arith.constant 0 : i32
    return %c0_i32, %c0_i32_0 : i32, i32
  }
}

</mosaic_0001>

<llo_original>
// kernel: _forward_impl.1
$region0: #{_forward_impl.1}
  #allocation0 [shape = 'u32[]', space=smem, size = 0x4, offset = 0x4, fixed_abs, tag = 'smem constant byte address 0x4 - core index']
  #allocation1 [shape = 'u32[144,128]{1,0:T(1,128)}', space=vmem, size = 0x12000, scoped, tag = 'internal scratch']
  %s0 = inlined_call_operand.vmem [shape: f32[2,1,1], index: 0, kind: input, shape index: {}]
  %s1 = inlined_call_operand.vmem [shape: bf16[2,3,256], index: 1, kind: input, shape index: {}]
  %s2 = inlined_call_operand.vmem [shape: bf16[2,3,256], index: 2, kind: input, shape index: {}]
  %s3 = inlined_call_operand.hbm [shape: f32[1,1], index: 3, kind: output, shape index: {0}]
  %s4 = inlined_call_operand.hbm [shape: f32[1,1], index: 4, kind: output, shape index: {1}]
  %5 = xla_tuple %s3, %s4
  %s6 = sld [smem:[#allocation0]]
  $region34: #{_forward_impl.1} parent=0
    _
  %s8 = ssub.s32 1, %s6
  %s9 = scalar_select 0, %s8, %s6
  $region1: #{_forward_impl.1} parent=0
    #allocation2 [shape = 'u8[512]{0}', space=vmem, size = 0x400, scoped, tag = 'output window, operand 0, single buffered']
    #allocation3 [shape = 's32[1]{0}', space=sflag, size = 0x4, scoped, tag = 'scoped memory for _forward_impl.1']
    #allocation4 [shape = 'u8[512]{0}', space=vmem, size = 0x400, scoped, tag = 'output window, operand 1, single buffered']
    #allocation5 [shape = 's32[1]{0}', space=sflag, size = 0x4, scoped, tag = 'scoped memory for _forward_impl.1']
    %10 = vsyncpa [#allocation3], 0
    %11 = vsyncpa [#allocation5], 0
    // Predicated region
    $region2: #{_forward_impl.1} parent=1 // pred_check
      _
    $region3: #{_forward_impl.1} parent=1 // pred_check_branch
      %13 = sbr.rel (0) target = $region5
    $region4: #{_forward_impl.1} parent=1 // pred_region
      _
    $region5: #{_forward_impl.1} parent=1 // pred_fallthru
      _
    // Predicated region
    $region6: #{_forward_impl.1} parent=1 // pred_check
      _
    $region7: #{_forward_impl.1} parent=1 // pred_check_branch
      %15 = sbr.rel (0) target = $region9
    $region8: #{_forward_impl.1} parent=1 // pred_region
      _
    $region9: #{_forward_impl.1} parent=1 // pred_fallthru
      _
    // Predicated region
    $region10: #{_forward_impl.1} parent=1 // pred_check
      _
    $region11: #{_forward_impl.1} parent=1 // pred_check_branch
      %17 = sbr.rel (0) target = $region13
    $region12: #{_forward_impl.1} parent=1 // pred_region
      _
    $region13: #{_forward_impl.1} parent=1 // pred_fallthru
      _
    %p18 = scmp.eq.s32.totalorder 0, 0
    %p19 = scmp.eq.s32.totalorder 0, 0
    %p20 = pnand %p18, %p19
    %p21 = pneg %p20
    // Predicated region
    $region14: #{_forward_impl.1} parent=1 // pred_check
      _
    $region15: #{_forward_impl.1} parent=1 // pred_check_branch
      %23 = sbr.rel (%p20) target = $region17
    $region16: #{_forward_impl.1} parent=1 // pred_region
      %vm24 = vcmask 0
      %25 = vst.msk [vmem:[#allocation2] sm:$0x1] %vm24, 0.0
      %26 = vst.msk [vmem:[#allocation4] sm:$0x1] %vm24, 0.0
    $region17: #{_forward_impl.1} parent=1 // pred_fallthru
      _
    %v27 = vld [vmem:[%s1] sm:$0xf]
    %v28 = vld [vmem:[%s1 + $0x4] sm:$0xf]
    %v29 = vunpack.c.l.bf16 %v27
    %v30 = vunpack.c.l.bf16 %v28
    %v31 = vld [vmem:[%s2] sm:$0xf]
    %v32 = vld [vmem:[%s2 + $0x4] sm:$0xf]
    %v33 = vunpack.c.l.bf16 %v31
    %v34 = vunpack.c.l.bf16 %v32
    %v35 = vld [vmem:[%s0] sm:$0x1]
    %v36 = vld [vmem:[%s0 + $0x1] sm:$0x1]
    %v39 = vlaneseq
    %v40 = vshrl.u32 %v39, 7
    %v41 = vsub.s32 0, %v40
    %v42 = vrot.slane %v35, %v41
    %v43 = vlaneseq
    %v44 = vshrl.u32 %v43, 7
    %v45 = vsub.s32 0, %v44
    %v46 = vrot.slane %v36, %v45
    %47 = vset.pattern.permute.xlu0 0
    %48 = vperm.xlu0 %47, %v42
    %v49 = vpop.permute.xlu0 %48
    %51 = vset.pattern.permute.xlu0 0
    %52 = vperm.xlu0 %51, %v46
    %v53 = vpop.permute.xlu0 %52
    %v55 = vmul.f32 %v49, %v29
    %v56 = vmul.f32 %v53, %v30
    %v57 = vsub.f32 1.0, %v35
    %v58 = vsub.f32 1.0, %v36
    %v61 = vlaneseq
    %v62 = vshrl.u32 %v61, 7
    %v63 = vsub.s32 0, %v62
    %v64 = vrot.slane %v57, %v63
    %v65 = vlaneseq
    %v66 = vshrl.u32 %v65, 7
    %v67 = vsub.s32 0, %v66
    %v68 = vrot.slane %v58, %v67
    %69 = vset.pattern.permute.xlu0 0
    %70 = vperm.xlu0 %69, %v64
    %v71 = vpop.permute.xlu0 %70
    %73 = vset.pattern.permute.xlu0 0
    %74 = vperm.xlu0 %73, %v68
    %v75 = vpop.permute.xlu0 %74
    %v77 = vmul.f32 %v71, %v33
    %v78 = vmul.f32 %v75, %v34
    %v79 = vadd.f32 %v55, %v77
    %v80 = vadd.f32 %v56, %v78
    %v81 = vmul.f32 %v79, -0.425
    %v82 = vmul.f32 %v80, -0.425
    %v83 = vadd.f32 %v81, -0.1
    %v84 = vadd.f32 %v82, -0.1
    %v85 = vmul.f32 %v35, 0.255
    %v86 = vmul.f32 %v36, 0.255
    %88 = vset.pattern.permute.xlu0 0
    %89 = vperm.xlu0 %88, %v85
    %v90 = vpop.permute.xlu0 %89
    %v92 = vlaneseq
    %v93 = vshrl.u32 %v92, 7
    %v94 = vsub.s32 0, %v93
    %v95 = vrot.slane %v90, %v94
    %97 = vset.pattern.permute.xlu0 0
    %98 = vperm.xlu0 %97, %v86
    %v99 = vpop.permute.xlu0 %98
    %v101 = vlaneseq
    %v102 = vshrl.u32 %v101, 7
    %v103 = vsub.s32 0, %v102
    %v104 = vrot.slane %v99, %v103
    %v105 = vadd.f32 %v83, %v95
    %v106 = vadd.f32 %v84, %v104
    %v107 = vmul.f32 %v79, -0.375
    %v108 = vmul.f32 %v80, -0.375
    %v111 = vrot.slane %v107, 5
    %v112 = vrot.slane %v111, 4
    %v113 = vrot.slane %v108, 5
    %v114 = vrot.slane %v113, 4
    %v117 = vadd.f32 %v105, %v112
    %v118 = vadd.f32 %v106, %v114
    %v119 = vmul.f32 %v35, 0.225
    %v120 = vmul.f32 %v36, 0.225
    %122 = vset.pattern.permute.xlu0 0
    %123 = vperm.xlu0 %122, %v119
    %v124 = vpop.permute.xlu0 %123
    %v126 = vlaneseq
    %v127 = vshrl.u32 %v126, 7
    %v128 = vsub.s32 0, %v127
    %v129 = vrot.slane %v124, %v128
    %131 = vset.pattern.permute.xlu0 0
    %132 = vperm.xlu0 %131, %v120
    %v133 = vpop.permute.xlu0 %132
    %v135 = vlaneseq
    %v136 = vshrl.u32 %v135, 7
    %v137 = vsub.s32 0, %v136
    %v138 = vrot.slane %v133, %v137
    %v139 = vadd.f32 %v117, %v129
    %v140 = vadd.f32 %v118, %v138
    %v141 = vmul.f32 %v79, -0.32500002
    %v142 = vmul.f32 %v80, -0.32500002
    %v145 = vrot.slane %v141, 6
    %v146 = vrot.slane %v145, 4
    %v147 = vrot.slane %v142, 6
    %v148 = vrot.slane %v147, 4
    %v151 = vadd.f32 %v139, %v146
    %v152 = vadd.f32 %v140, %v148
    %v153 = vmul.f32 %v35, 0.195
    %v154 = vmul.f32 %v36, 0.195
    %156 = vset.pattern.permute.xlu0 0
    %157 = vperm.xlu0 %156, %v153
    %v158 = vpop.permute.xlu0 %157
    %v160 = vlaneseq
    %v161 = vshrl.u32 %v160, 7
    %v162 = vsub.s32 0, %v161
    %v163 = vrot.slane %v158, %v162
    %165 = vset.pattern.permute.xlu0 0
    %166 = vperm.xlu0 %165, %v154
    %v167 = vpop.permute.xlu0 %166
    %v169 = vlaneseq
    %v170 = vshrl.u32 %v169, 7
    %v171 = vsub.s32 0, %v170
    %v172 = vrot.slane %v167, %v171
    %v173 = vadd.f32 %v151, %v163
    %v174 = vadd.f32 %v152, %v172
    %v175 = vmul.f32 %v33, 2.0
    %v176 = vmul.f32 %v34, 2.0
    %v177 = vsub.f32 %v173, %v175
    %v178 = vsub.f32 %v174, %v176
    %v179 = vmul.f32 %v173, %v177
    %v180 = vmul.f32 %v174, %v178
    %v181 = vmul.f32 %v79, -0.275
    %v182 = vmul.f32 %v80, -0.275
    %v183 = vadd.f32 %v181, -0.06
    %v184 = vadd.f32 %v182, -0.06
    %v185 = vmul.f32 %v35, 0.16499999
    %v186 = vmul.f32 %v36, 0.16499999
    %188 = vset.pattern.permute.xlu0 0
    %189 = vperm.xlu0 %188, %v185
    %v190 = vpop.permute.xlu0 %189
    %v192 = vlaneseq
    %v193 = vshrl.u32 %v192, 7
    %v194 = vsub.s32 0, %v193
    %v195 = vrot.slane %v190, %v194
    %197 = vset.pattern.permute.xlu0 0
    %198 = vperm.xlu0 %197, %v186
    %v199 = vpop.permute.xlu0 %198
    %v201 = vlaneseq
    %v202 = vshrl.u32 %v201, 7
    %v203 = vsub.s32 0, %v202
    %v204 = vrot.slane %v199, %v203
    %v205 = vadd.f32 %v183, %v195
    %v206 = vadd.f32 %v184, %v204
    %v207 = vmul.f32 %v79, -0.22500001
    %v208 = vmul.f32 %v80, -0.22500001
    %v211 = vrot.slane %v207, 5
    %v212 = vrot.slane %v211, 4
    %v213 = vrot.slane %v208, 5
    %v214 = vrot.slane %v213, 4
    %v217 = vadd.f32 %v205, %v212
    %v218 = vadd.f32 %v206, %v214
    %v219 = vmul.f32 %v35, 0.13499999
    %v220 = vmul.f32 %v36, 0.13499999
    %222 = vset.pattern.permute.xlu0 0
    %223 = vperm.xlu0 %222, %v219
    %v224 = vpop.permute.xlu0 %223
    %v226 = vlaneseq
    %v227 = vshrl.u32 %v226, 7
    %v228 = vsub.s32 0, %v227
    %v229 = vrot.slane %v224, %v228
    %231 = vset.pattern.permute.xlu0 0
    %232 = vperm.xlu0 %231, %v220
    %v233 = vpop.permute.xlu0 %232
    %v235 = vlaneseq
    %v236 = vshrl.u32 %v235, 7
    %v237 = vsub.s32 0, %v236
    %v238 = vrot.slane %v233, %v237
    %v239 = vadd.f32 %v217, %v229
    %v240 = vadd.f32 %v218, %v238
    %v241 = vmul.f32 %v79, -0.175
    %v242 = vmul.f32 %v80, -0.175
    %v245 = vrot.slane %v241, 6
    %v246 = vrot.slane %v245, 4
    %v247 = vrot.slane %v242, 6
    %v248 = vrot.slane %v247, 4
    %v251 = vadd.f32 %v239, %v246
    %v252 = vadd.f32 %v240, %v248
    %v253 = vmul.f32 %v35, 0.105
    %v254 = vmul.f32 %v36, 0.105
    %256 = vset.pattern.permute.xlu0 0
    %257 = vperm.xlu0 %256, %v253
    %v258 = vpop.permute.xlu0 %257
    %v260 = vlaneseq
    %v261 = vshrl.u32 %v260, 7
    %v262 = vsub.s32 0, %v261
    %v263 = vrot.slane %v258, %v262
    %265 = vset.pattern.permute.xlu0 0
    %266 = vperm.xlu0 %265, %v254
    %v267 = vpop.permute.xlu0 %266
    %v269 = vlaneseq
    %v270 = vshrl.u32 %v269, 7
    %v271 = vsub.s32 0, %v270
    %v272 = vrot.slane %v267, %v271
    %v273 = vadd.f32 %v251, %v263
    %v274 = vadd.f32 %v252, %v272
    %v277 = vrot.slane %v175, 5
    %v278 = vrot.slane %v277, 4
    %v279 = vrot.slane %v176, 5
    %v280 = vrot.slane %v279, 4
    %v283 = vsub.f32 %v273, %v278
    %v284 = vsub.f32 %v274, %v280
    %v285 = vmul.f32 %v273, %v283
    %v286 = vmul.f32 %v274, %v284
    %v287 = vadd.f32 %v179, %v285
    %v288 = vadd.f32 %v180, %v286
    %v289 = vmul.f32 %v79, -0.125
    %v290 = vmul.f32 %v80, -0.125
    %v291 = vadd.f32 %v289, -0.02
    %v292 = vadd.f32 %v290, -0.02
    %v293 = vmul.f32 %v35, 0.074999996
    %v294 = vmul.f32 %v36, 0.074999996
    %296 = vset.pattern.permute.xlu0 0
    %297 = vperm.xlu0 %296, %v293
    %v298 = vpop.permute.xlu0 %297
    %v300 = vlaneseq
    %v301 = vshrl.u32 %v300, 7
    %v302 = vsub.s32 0, %v301
    %v303 = vrot.slane %v298, %v302
    %305 = vset.pattern.permute.xlu0 0
    %306 = vperm.xlu0 %305, %v294
    %v307 = vpop.permute.xlu0 %306
    %v309 = vlaneseq
    %v310 = vshrl.u32 %v309, 7
    %v311 = vsub.s32 0, %v310
    %v312 = vrot.slane %v307, %v311
    %v313 = vadd.f32 %v291, %v303
    %v314 = vadd.f32 %v292, %v312
    %v315 = vmul.f32 %v79, -0.075
    %v316 = vmul.f32 %v80, -0.075
    %v319 = vrot.slane %v315, 5
    %v320 = vrot.slane %v319, 4
    %v321 = vrot.slane %v316, 5
    %v322 = vrot.slane %v321, 4
    %v325 = vadd.f32 %v313, %v320
    %v326 = vadd.f32 %v314, %v322
    %v327 = vmul.f32 %v35, 0.044999998
    %v328 = vmul.f32 %v36, 0.044999998
    %330 = vset.pattern.permute.xlu0 0
    %331 = vperm.xlu0 %330, %v327
    %v332 = vpop.permute.xlu0 %331
    %v334 = vlaneseq
    %v335 = vshrl.u32 %v334, 7
    %v336 = vsub.s32 0, %v335
    %v337 = vrot.slane %v332, %v336
    %339 = vset.pattern.permute.xlu0 0
    %340 = vperm.xlu0 %339, %v328
    %v341 = vpop.permute.xlu0 %340
    %v343 = vlaneseq
    %v344 = vshrl.u32 %v343, 7
    %v345 = vsub.s32 0, %v344
    %v346 = vrot.slane %v341, %v345
    %v347 = vadd.f32 %v325, %v337
    %v348 = vadd.f32 %v326, %v346
    %v349 = vmul.f32 %v79, -0.025
    %v350 = vmul.f32 %v80, -0.025
    %v353 = vrot.slane %v349, 6
    %v354 = vrot.slane %v353, 4
    %v355 = vrot.slane %v350, 6
    %v356 = vrot.slane %v355, 4
    %v359 = vadd.f32 %v347, %v354
    %v360 = vadd.f32 %v348, %v356
    %v361 = vmul.f32 %v35, 0.015
    %v362 = vmul.f32 %v36, 0.015
    %364 = vset.pattern.permute.xlu0 0
    %365 = vperm.xlu0 %364, %v361
    %v366 = vpop.permute.xlu0 %365
    %v368 = vlaneseq
    %v369 = vshrl.u32 %v368, 7
    %v370 = vsub.s32 0, %v369
    %v371 = vrot.slane %v366, %v370
    %373 = vset.pattern.permute.xlu0 0
    %374 = vperm.xlu0 %373, %v362
    %v375 = vpop.permute.xlu0 %374
    %v377 = vlaneseq
    %v378 = vshrl.u32 %v377, 7
    %v379 = vsub.s32 0, %v378
    %v380 = vrot.slane %v375, %v379
    %v381 = vadd.f32 %v359, %v371
    %v382 = vadd.f32 %v360, %v380
    %v383 = vrot.slane %v175, 6
    %v384 = vrot.slane %v383, 4
    %v385 = vrot.slane %v176, 6
    %v386 = vrot.slane %v385, 4
    %v389 = vsub.f32 %v381, %v384
    %v390 = vsub.f32 %v382, %v386
    %v391 = vmul.f32 %v381, %v389
    %v392 = vmul.f32 %v382, %v390
    %v393 = vadd.f32 %v287, %v391
    %v394 = vadd.f32 %v288, %v392
    %v395 = vmul.f32 %v79, 0.025
    %v396 = vmul.f32 %v80, 0.025
    %v397 = vadd.f32 %v395, 0.02
    %v398 = vadd.f32 %v396, 0.02
    %v399 = vmul.f32 %v35, -0.015
    %v400 = vmul.f32 %v36, -0.015
    %402 = vset.pattern.permute.xlu0 0
    %403 = vperm.xlu0 %402, %v399
    %v404 = vpop.permute.xlu0 %403
    %v406 = vlaneseq
    %v407 = vshrl.u32 %v406, 7
    %v408 = vsub.s32 0, %v407
    %v409 = vrot.slane %v404, %v408
    %411 = vset.pattern.permute.xlu0 0
    %412 = vperm.xlu0 %411, %v400
    %v413 = vpop.permute.xlu0 %412
    %v415 = vlaneseq
    %v416 = vshrl.u32 %v415, 7
    %v417 = vsub.s32 0, %v416
    %v418 = vrot.slane %v413, %v417
    %v419 = vadd.f32 %v397, %v409
    %v420 = vadd.f32 %v398, %v418
    %v421 = vmul.f32 %v79, 0.075
    %v422 = vmul.f32 %v80, 0.075
    %v425 = vrot.slane %v421, 5
    %v426 = vrot.slane %v425, 4
    %v427 = vrot.slane %v422, 5
    %v428 = vrot.slane %v427, 4
    %v431 = vadd.f32 %v419, %v426
    %v432 = vadd.f32 %v420, %v428
    %v433 = vmul.f32 %v35, -0.044999998
    %v434 = vmul.f32 %v36, -0.044999998
    %436 = vset.pattern.permute.xlu0 0
    %437 = vperm.xlu0 %436, %v433
    %v438 = vpop.permute.xlu0 %437
    %v440 = vlaneseq
    %v441 = vshrl.u32 %v440, 7
    %v442 = vsub.s32 0, %v441
    %v443 = vrot.slane %v438, %v442
    %445 = vset.pattern.permute.xlu0 0
    %446 = vperm.xlu0 %445, %v434
    %v447 = vpop.permute.xlu0 %446
    %v449 = vlaneseq
    %v450 = vshrl.u32 %v449, 7
    %v451 = vsub.s32 0, %v450
    %v452 = vrot.slane %v447, %v451
    %v453 = vadd.f32 %v431, %v443
    %v454 = vadd.f32 %v432, %v452
    %v455 = vmul.f32 %v79, 0.125
    %v456 = vmul.f32 %v80, 0.125
    %v459 = vrot.slane %v455, 6
    %v460 = vrot.slane %v459, 4
    %v461 = vrot.slane %v456, 6
    %v462 = vrot.slane %v461, 4
    %v465 = vadd.f32 %v453, %v460
    %v466 = vadd.f32 %v454, %v462
    %v467 = vmul.f32 %v35, -0.074999996
    %v468 = vmul.f32 %v36, -0.074999996
    %470 = vset.pattern.permute.xlu0 0
    %471 = vperm.xlu0 %470, %v467
    %v472 = vpop.permute.xlu0 %471
    %v474 = vlaneseq
    %v475 = vshrl.u32 %v474, 7
    %v476 = vsub.s32 0, %v475
    %v477 = vrot.slane %v472, %v476
    %479 = vset.pattern.permute.xlu0 0
    %480 = vperm.xlu0 %479, %v468
    %v481 = vpop.permute.xlu0 %480
    %v483 = vlaneseq
    %v484 = vshrl.u32 %v483, 7
    %v485 = vsub.s32 0, %v484
    %v486 = vrot.slane %v481, %v485
    %v487 = vadd.f32 %v465, %v477
    %v488 = vadd.f32 %v466, %v486
    %v489 = vmul.f32 %v29, 2.0
    %v490 = vmul.f32 %v30, 2.0
    %v491 = vsub.f32 %v487, %v489
    %v492 = vsub.f32 %v488, %v490
    %v493 = vmul.f32 %v487, %v491
    %v494 = vmul.f32 %v488, %v492
    %v495 = vmul.f32 %v79, 0.175
    %v496 = vmul.f32 %v80, 0.175
    %v497 = vadd.f32 %v495, 0.06
    %v498 = vadd.f32 %v496, 0.06
    %v499 = vmul.f32 %v35, -0.105
    %v500 = vmul.f32 %v36, -0.105
    %502 = vset.pattern.permute.xlu0 0
    %503 = vperm.xlu0 %502, %v499
    %v504 = vpop.permute.xlu0 %503
    %v506 = vlaneseq
    %v507 = vshrl.u32 %v506, 7
    %v508 = vsub.s32 0, %v507
    %v509 = vrot.slane %v504, %v508
    %511 = vset.pattern.permute.xlu0 0
    %512 = vperm.xlu0 %511, %v500
    %v513 = vpop.permute.xlu0 %512
    %v515 = vlaneseq
    %v516 = vshrl.u32 %v515, 7
    %v517 = vsub.s32 0, %v516
    %v518 = vrot.slane %v513, %v517
    %v519 = vadd.f32 %v497, %v509
    %v520 = vadd.f32 %v498, %v518
    %v521 = vmul.f32 %v79, 0.22500001
    %v522 = vmul.f32 %v80, 0.22500001
    %v525 = vrot.slane %v521, 5
    %v526 = vrot.slane %v525, 4
    %v527 = vrot.slane %v522, 5
    %v528 = vrot.slane %v527, 4
    %v531 = vadd.f32 %v519, %v526
    %v532 = vadd.f32 %v520, %v528
    %v533 = vmul.f32 %v35, -0.13499999
    %v534 = vmul.f32 %v36, -0.13499999
    %536 = vset.pattern.permute.xlu0 0
    %537 = vperm.xlu0 %536, %v533
    %v538 = vpop.permute.xlu0 %537
    %v540 = vlaneseq
    %v541 = vshrl.u32 %v540, 7
    %v542 = vsub.s32 0, %v541
    %v543 = vrot.slane %v538, %v542
    %545 = vset.pattern.permute.xlu0 0
    %546 = vperm.xlu0 %545, %v534
    %v547 = vpop.permute.xlu0 %546
    %v549 = vlaneseq
    %v550 = vshrl.u32 %v549, 7
    %v551 = vsub.s32 0, %v550
    %v552 = vrot.slane %v547, %v551
    %v553 = vadd.f32 %v531, %v543
    %v554 = vadd.f32 %v532, %v552
    %v555 = vmul.f32 %v79, 0.275
    %v556 = vmul.f32 %v80, 0.275
    %v559 = vrot.slane %v555, 6
    %v560 = vrot.slane %v559, 4
    %v561 = vrot.slane %v556, 6
    %v562 = vrot.slane %v561, 4
    %v565 = vadd.f32 %v553, %v560
    %v566 = vadd.f32 %v554, %v562
    %v567 = vmul.f32 %v35, -0.16499999
    %v568 = vmul.f32 %v36, -0.16499999
    %570 = vset.pattern.permute.xlu0 0
    %571 = vperm.xlu0 %570, %v567
    %v572 = vpop.permute.xlu0 %571
    %v574 = vlaneseq
    %v575 = vshrl.u32 %v574, 7
    %v576 = vsub.s32 0, %v575
    %v577 = vrot.slane %v572, %v576
    %579 = vset.pattern.permute.xlu0 0
    %580 = vperm.xlu0 %579, %v568
    %v581 = vpop.permute.xlu0 %580
    %v583 = vlaneseq
    %v584 = vshrl.u32 %v583, 7
    %v585 = vsub.s32 0, %v584
    %v586 = vrot.slane %v581, %v585
    %v587 = vadd.f32 %v565, %v577
    %v588 = vadd.f32 %v566, %v586
    %v591 = vrot.slane %v489, 5
    %v592 = vrot.slane %v591, 4
    %v593 = vrot.slane %v490, 5
    %v594 = vrot.slane %v593, 4
    %v597 = vsub.f32 %v587, %v592
    %v598 = vsub.f32 %v588, %v594
    %v599 = vmul.f32 %v587, %v597
    %v600 = vmul.f32 %v588, %v598
    %v601 = vadd.f32 %v493, %v599
    %v602 = vadd.f32 %v494, %v600
    %v603 = vmul.f32 %v79, 0.32500002
    %v604 = vmul.f32 %v80, 0.32500002
    %v605 = vadd.f32 %v603, 0.1
    %v606 = vadd.f32 %v604, 0.1
    %v607 = vmul.f32 %v35, -0.195
    %v608 = vmul.f32 %v36, -0.195
    %610 = vset.pattern.permute.xlu0 0
    %611 = vperm.xlu0 %610, %v607
    %v612 = vpop.permute.xlu0 %611
    %v614 = vlaneseq
    %v615 = vshrl.u32 %v614, 7
    %v616 = vsub.s32 0, %v615
    %v617 = vrot.slane %v612, %v616
    %619 = vset.pattern.permute.xlu0 0
    %620 = vperm.xlu0 %619, %v608
    %v621 = vpop.permute.xlu0 %620
    %v623 = vlaneseq
    %v624 = vshrl.u32 %v623, 7
    %v625 = vsub.s32 0, %v624
    %v626 = vrot.slane %v621, %v625
    %v627 = vadd.f32 %v605, %v617
    %v628 = vadd.f32 %v606, %v626
    %v629 = vmul.f32 %v79, 0.375
    %v630 = vmul.f32 %v80, 0.375
    %v633 = vrot.slane %v629, 5
    %v634 = vrot.slane %v633, 4
    %v635 = vrot.slane %v630, 5
    %v636 = vrot.slane %v635, 4
    %v639 = vadd.f32 %v627, %v634
    %v640 = vadd.f32 %v628, %v636
    %v641 = vmul.f32 %v35, -0.225
    %v642 = vmul.f32 %v36, -0.225
    %644 = vset.pattern.permute.xlu0 0
    %645 = vperm.xlu0 %644, %v641
    %v646 = vpop.permute.xlu0 %645
    %v648 = vlaneseq
    %v649 = vshrl.u32 %v648, 7
    %v650 = vsub.s32 0, %v649
    %v651 = vrot.slane %v646, %v650
    %653 = vset.pattern.permute.xlu0 0
    %654 = vperm.xlu0 %653, %v642
    %v655 = vpop.permute.xlu0 %654
    %v657 = vlaneseq
    %v658 = vshrl.u32 %v657, 7
    %v659 = vsub.s32 0, %v658
    %v660 = vrot.slane %v655, %v659
    %v661 = vadd.f32 %v639, %v651
    %v662 = vadd.f32 %v640, %v660
    %v663 = vmul.f32 %v79, 0.425
    %v664 = vmul.f32 %v80, 0.425
    %v667 = vrot.slane %v663, 6
    %v668 = vrot.slane %v667, 4
    %v669 = vrot.slane %v664, 6
    %v670 = vrot.slane %v669, 4
    %v673 = vadd.f32 %v661, %v668
    %v674 = vadd.f32 %v662, %v670
    %v675 = vmul.f32 %v35, -0.255
    %v676 = vmul.f32 %v36, -0.255
    %678 = vset.pattern.permute.xlu0 0
    %679 = vperm.xlu0 %678, %v675
    %v680 = vpop.permute.xlu0 %679
    %v682 = vlaneseq
    %v683 = vshrl.u32 %v682, 7
    %v684 = vsub.s32 0, %v683
    %v685 = vrot.slane %v680, %v684
    %687 = vset.pattern.permute.xlu0 0
    %688 = vperm.xlu0 %687, %v676
    %v689 = vpop.permute.xlu0 %688
    %v691 = vlaneseq
    %v692 = vshrl.u32 %v691, 7
    %v693 = vsub.s32 0, %v692
    %v694 = vrot.slane %v689, %v693
    %v695 = vadd.f32 %v673, %v685
    %v696 = vadd.f32 %v674, %v694
    %v697 = vrot.slane %v489, 6
    %v698 = vrot.slane %v697, 4
    %v699 = vrot.slane %v490, 6
    %v700 = vrot.slane %v699, 4
    %v703 = vsub.f32 %v695, %v698
    %v704 = vsub.f32 %v696, %v700
    %v705 = vmul.f32 %v695, %v703
    %v706 = vmul.f32 %v696, %v704
    %v707 = vadd.f32 %v601, %v705
    %v708 = vadd.f32 %v602, %v706
    %v711 = vlaneseq
    %v712 = vshrl.u32 %v711, 7
    %v713 = vsub.s32 0, %v712
    %v714 = vrot.slane %v393, %v713
    %v715 = vlaneseq
    %v716 = vshrl.u32 %v715, 7
    %v717 = vsub.s32 4, %v716
    %v718 = vrot.slane %v393, %v717
    %v719 = vlaneseq
    %v720 = vshrl.u32 %v719, 7
    %v721 = vsub.s32 0, %v720
    %v722 = vrot.slane %v394, %v721
    %v723 = vlaneseq
    %v724 = vshrl.u32 %v723, 7
    %v725 = vsub.s32 4, %v724
    %v726 = vrot.slane %v394, %v725
    %vm727 = vcmask 1041409
    %v728 = vsel %vm727, %v722, %v714
    %v729 = vsel %vm727, %v726, %v718
    %vm732 = vcmask 1041408
    %v733 = vsel %vm732, %v728, 0.0
    %v734 = vsel %vm732, %v729, 0.0
    %v735 = vadd.f32 %v733, %v734
    %736 = vadd.xlane.f32.xlu0 %v735
    %v737 = vpop.xlane.xlu0 %736
    %v738 = vrot.slane %v737, 4
    %v739 = vadd.f32 %v737, %v738
    %v740 = vrot.slane %v739, 2
    %v741 = vadd.f32 %v739, %v740
    %v742 = vrot.slane %v741, 1
    %v743 = vadd.f32 %v741, %v742
    %s744 = vtos %v743
    %v747 = vlaneseq
    %v748 = vshrl.u32 %v747, 7
    %v749 = vsub.s32 0, %v748
    %v750 = vrot.slane %v707, %v749
    %v751 = vlaneseq
    %v752 = vshrl.u32 %v751, 7
    %v753 = vsub.s32 4, %v752
    %v754 = vrot.slane %v707, %v753
    %v755 = vlaneseq
    %v756 = vshrl.u32 %v755, 7
    %v757 = vsub.s32 0, %v756
    %v758 = vrot.slane %v708, %v757
    %v759 = vlaneseq
    %v760 = vshrl.u32 %v759, 7
    %v761 = vsub.s32 4, %v760
    %v762 = vrot.slane %v708, %v761
    %v763 = vsel %vm727, %v758, %v750
    %v764 = vsel %vm727, %v762, %v754
    %v767 = vsel %vm732, %v763, 0.0
    %v768 = vsel %vm732, %v764, 0.0
    %v769 = vadd.f32 %v767, %v768
    %770 = vadd.xlane.f32.xlu0 %v769
    %v771 = vpop.xlane.xlu0 %770
    %v772 = vrot.slane %v771, 4
    %v773 = vadd.f32 %v771, %v772
    %v774 = vrot.slane %v773, 2
    %v775 = vadd.f32 %v773, %v774
    %v776 = vrot.slane %v775, 1
    %v777 = vadd.f32 %v775, %v776
    %s778 = vtos %v777
    %v779 = vld [vmem:[#allocation2] sm:$0x1]
    %v780 = vstv %s744
    %v781 = vadd.f32 %v779, %v780
    %vm782 = vcmask 0
    %783 = vst.msk [vmem:[#allocation2] sm:$0x1] %vm782, %v781
    %v784 = vld [vmem:[#allocation4] sm:$0x1]
    %v785 = vstv %s778
    %v786 = vadd.f32 %v784, %v785
    %787 = vst.msk [vmem:[#allocation4] sm:$0x1] %vm782, %v786
    // Predicated region
    $region18: #{_forward_impl.1} parent=1 // pred_check
      _
    $region19: #{_forward_impl.1} parent=1 // pred_check_branch
      %789 = sbr.rel (0) target = $region21
    $region20: #{_forward_impl.1} parent=1 // pred_region
      %s791 = ssub.s32 16, 16
      %792 = vsyncadd [#allocation3], %s791
      %s794 = sshll.u32 [#allocation2], 4
      %s795 = int_to_ptr.vmem [resolvable:$true] %s794
      %797 = dma.vmem_to_hbm [thread:$0]  %s795, 16, %s3, [#allocation3]
    $region21: #{_forward_impl.1} parent=1 // pred_fallthru
      _
    // Predicated region
    $region22: #{_forward_impl.1} parent=1 // pred_check
      _
    $region23: #{_forward_impl.1} parent=1 // pred_check_branch
      %799 = sbr.rel (0) target = $region25
    $region24: #{_forward_impl.1} parent=1 // pred_region
      %s801 = ssub.s32 16, 16
      %802 = vsyncadd [#allocation5], %s801
      %s804 = sshll.u32 [#allocation4], 4
      %s805 = int_to_ptr.vmem [resolvable:$true] %s804
      %807 = dma.vmem_to_hbm [thread:$0]  %s805, 16, %s4, [#allocation5]
    $region25: #{_forward_impl.1} parent=1 // pred_fallthru
      _
    // Predicated region
    $region26: #{_forward_impl.1} parent=1 // pred_check
      _
    $region27: #{_forward_impl.1} parent=1 // pred_check_branch
      %809 = sbr.rel (0) target = $region29
    $region28: #{_forward_impl.1} parent=1 // pred_region
      %810 = dma.done [#allocation3], 16
    $region29: #{_forward_impl.1} parent=1 // pred_fallthru
      _
    // Predicated region
    $region30: #{_forward_impl.1} parent=1 // pred_check
      _
    $region31: #{_forward_impl.1} parent=1 // pred_check_branch
      %812 = sbr.rel (0) target = $region33
    $region32: #{_forward_impl.1} parent=1 // pred_region
      %813 = dma.done [#allocation5], 16
    $region33: #{_forward_impl.1} parent=1 // pred_fallthru
      _
    %814 = vsyncpa [#allocation3], 1
    %815 = vsyncpa [#allocation5], 1

</llo_original>
